<compile_context>
chip_gen: v7x
topology: tpu7x:2x2x1
jax: 0.10.0
libtpu: 0.0.40
codegen_flags: <defaults>
</compile_context>

<pallas_src>
import jax
import jax.numpy as jnp
from jax.experimental import pallas as pl
from jax.experimental.pallas import tpu as pltpu


def _round_up(n, m):
    return (n + m - 1) // m * m


# ---------------------------------------------------------------------------
# Kernel: three MXU matmuls (conv + concat already folded into the weights).
# ---------------------------------------------------------------------------
def projector_kernel(x_ref, s_ref, wx_ref, ws_ref, b1_ref, w2_ref, b2_ref,
                     w3_ref, out_ref):
    h = (jnp.dot(x_ref[...], wx_ref[...], preferred_element_type=jnp.float32)
         + jnp.dot(s_ref[...], ws_ref[...], preferred_element_type=jnp.float32)
         + b1_ref[...])
    h = jnp.maximum(h, 0.0)
    h = jnp.dot(h, w2_ref[...], preferred_element_type=jnp.float32) + b2_ref[...]
    h = jnp.maximum(h, 0.0)
    out_ref[...] = jnp.dot(h, w3_ref[...], preferred_element_type=jnp.float32)


# ---------------------------------------------------------------------------
# One-time parameter preparation (pure JAX, outside the kernel).
# ---------------------------------------------------------------------------
def prepare_params(params, seq_len, enc_in):
    """Fold circular Conv1d (linear in x) + concat into the first Linear, and
    zero-pad hidden dims to a lane-dense 128.

    conv_w: (seq_len, 3)   -- torch weight (1, seq_len, 3) squeezed
    w1:     (2*enc_in, H1)
    """
    S, L = seq_len, enc_in
    cw = params["conv_w"].astype(jnp.float32)   # (S, 3)
    w1 = params["w1"]                           # (2L, H1)
    H1 = w1.shape[1]
    H2 = params["w2"].shape[1]
    w1_top, w1_bot = w1[:L], w1[L:]

    # conv[b, l] = sum_{s,k} cw[s, k] * x[b, s, (l + k - 1) mod L]
    # Build C[s, l', l] = sum_k cw[s, k] * [l' == (l + k - 1) mod L]
    l = jnp.arange(L)
    C = jnp.zeros((S, L, L), jnp.float32)
    for k in range(3):
        onehot = jax.nn.one_hot((l + k - 1) % L, L, axis=0, dtype=jnp.float32)
        C = C + cw[:, k][:, None, None] * onehot[None]
    wx = C.reshape(S * L, L) @ w1_top           # (S*L, H1)
    ws = w1_bot                                 # (L, H1)

    # Lane-dense hidden dims; padding is zero so padded lanes stay 0 through
    # ReLU and contribute nothing through w3. output_dim is NOT padded.
    H1p = _round_up(H1, 128)
    H2p = _round_up(H2, 128)
    return {
        "wx": jnp.pad(wx, ((0, 0), (0, H1p - H1))),
        "ws": jnp.pad(ws, ((0, 0), (0, H1p - H1))),
        "b1": jnp.pad(params["b1"], ((0, 0), (0, H1p - H1))),
        "w2": jnp.pad(params["w2"], ((0, H1p - H1), (0, H2p - H2))),
        "b2": jnp.pad(params["b2"], ((0, 0), (0, H2p - H2))),
        "w3": jnp.pad(params["w3"], ((0, H2p - H2), (0, 0))),
    }


# ---------------------------------------------------------------------------
# Wrapper: batch grid, resident weights, lane-dense input, unpadded output.
# ---------------------------------------------------------------------------
def projector_forward(x, stats, prepared, output_dim):
    B, S, L = x.shape
    assert prepared["w3"].shape[1] == output_dim

    # Lane-dense layouts (contiguous reshapes -> no HBM copy).
    x_flat = x.reshape(B, S * L)
    s_flat = stats.reshape(B, L)

    # Batch tile: one block for B <= 2048; 2048-row tiles above with a ragged
    # last block (rows independent, OOB rows never written back). No input pad.
    MAX_TB = 2048
    TB = B if B <= MAX_TB else MAX_TB
    grid = (pl.cdiv(B, TB),)

    batch_map = lambda i: (i, 0)
    resident = lambda i: (0, 0)      # weights stay resident across batch tiles
    in_specs = [
        pl.BlockSpec((TB, S * L), batch_map),
        pl.BlockSpec((TB, L), batch_map),
        pl.BlockSpec(prepared["wx"].shape, resident),
        pl.BlockSpec(prepared["ws"].shape, resident),
        pl.BlockSpec(prepared["b1"].shape, resident),
        pl.BlockSpec(prepared["w2"].shape, resident),
        pl.BlockSpec(prepared["b2"].shape, resident),
        pl.BlockSpec(prepared["w3"].shape, resident),
    ]
    out_specs = pl.BlockSpec((TB, output_dim), batch_map)

    return pl.pallas_call(
        projector_kernel,
        out_shape=jax.ShapeDtypeStruct((B, output_dim), jnp.float32),
        grid=grid,
        in_specs=in_specs,
        out_specs=out_specs,
        compiler_params=pltpu.CompilerParams(
            dimension_semantics=("parallel",),     # megacore sharding on v7x
            vmem_limit_bytes=32 * 1024 * 1024,
        ),
    )(x_flat, s_flat, prepared["wx"], prepared["ws"], prepared["b1"],
      prepared["w2"], prepared["b2"], prepared["w3"])


# ---------------------------------------------------------------------------
# Params & pure-JAX reference (unfolded formulation -> validates the fold).
# ---------------------------------------------------------------------------
def init_params(key, enc_in, seq_len, hidden_dims, output_dim):
    k = jax.random.split(key, 6)
    scale = 0.1
    return {
        # torch conv weight is (1, seq_len, 3); stored here as (seq_len, 3)
        "conv_w": scale * jax.random.normal(k[0], (seq_len, 3), jnp.float32),
        "w1": scale * jax.random.normal(k[1], (2 * enc_in, hidden_dims[0]), jnp.float32),
        "b1": scale * jax.random.normal(k[2], (1, hidden_dims[0]), jnp.float32),
        "w2": scale * jax.random.normal(k[3], (hidden_dims[0], hidden_dims[1]), jnp.float32),
        "b2": scale * jax.random.normal(k[4], (1, hidden_dims[1]), jnp.float32),
        "w3": scale * jax.random.normal(k[5], (hidden_dims[1], output_dim), jnp.float32),
    }


def reference_forward(x, stats, params):
    # Original (unfolded) semantics: circular conv -> concat -> MLP.
    cw = params["conv_w"]                           # (S, 3)
    x_m1 = jnp.roll(x, 1, axis=2)                   # x[b,s,(l-1) mod L]  (k=0)
    x_p1 = jnp.roll(x, -1, axis=2)                  # x[b,s,(l+1) mod L]  (k=2)
    conv = (jnp.einsum("bsl,s->bl", x_m1, cw[:, 0]) +
            jnp.einsum("bsl,s->bl", x,    cw[:, 1]) +
            jnp.einsum("bsl,s->bl", x_p1, cw[:, 2]))
    feat = jnp.concatenate([conv, stats[:, 0, :]], axis=-1)
    h = jnp.maximum(feat @ params["w1"] + params["b1"], 0.0)
    h = jnp.maximum(h @ params["w2"] + params["b2"], 0.0)
    return h @ params["w3"]


if __name__ == "__main__":
    B, seq_len, enc_in = 2, 8, 16
    hidden_dims = [32, 32]          # hidden_layers = 2
    output_dim = 8

    key = jax.random.PRNGKey(0)
    kx, ks, kp = jax.random.split(key, 3)
    x = jax.random.normal(kx, (B, seq_len, enc_in), jnp.float32)
    stats = jax.random.normal(ks, (B, 1, enc_in), jnp.float32)
    params = init_params(kp, enc_in, seq_len, hidden_dims, output_dim)

    prepared = prepare_params(params, seq_len, enc_in)

    y = projector_forward(x, stats, prepared, output_dim)
    y = jax.block_until_ready(y)

    y_ref = reference_forward(x, stats, params)
    assert y.shape == (B, output_dim)
    assert jnp.allclose(y, y_ref, atol=1e-4, rtol=1e-4), "mismatch vs reference"

    print("KERNEL_OK")
</pallas_src>

<mosaic_0001>
module attributes {stable_mosaic.version = 11 : i64} {
  func.func @projector_kernel(%arg0: i32, %arg1: memref<2x128xf32, #tpu.memory_space<vmem>>, %arg2: memref<2x16xf32, #tpu.memory_space<vmem>>, %arg3: memref<128x128xf32, #tpu.memory_space<vmem>>, %arg4: memref<16x128xf32, #tpu.memory_space<vmem>>, %arg5: memref<1x128xf32, #tpu.memory_space<vmem>>, %arg6: memref<128x128xf32, #tpu.memory_space<vmem>>, %arg7: memref<1x128xf32, #tpu.memory_space<vmem>>, %arg8: memref<128x8xf32, #tpu.memory_space<vmem>>, %arg9: memref<2x8xf32, #tpu.memory_space<vmem>>) attributes {dimension_semantics = [#tpu.dimension_semantics<parallel>], iteration_bounds = array<i64: 1>, scalar_prefetch = 0 : i64, scratch_operands = 0 : i64, tpu.core_type = #tpu.core_type<tc>, window_params = [{transform_indices = @transform_0, window_bounds = array<i64: 2, 128>}, {transform_indices = @transform_1, window_bounds = array<i64: 2, 16>}, {pipeline_mode = #tpu.pipeline_mode<synchronous>, transform_indices = @transform_2, window_bounds = array<i64: 128, 128>}, {pipeline_mode = #tpu.pipeline_mode<synchronous>, transform_indices = @transform_3, window_bounds = array<i64: 16, 128>}, {pipeline_mode = #tpu.pipeline_mode<synchronous>, transform_indices = @transform_4, window_bounds = array<i64: 1, 128>}, {pipeline_mode = #tpu.pipeline_mode<synchronous>, transform_indices = @transform_5, window_bounds = array<i64: 128, 128>}, {pipeline_mode = #tpu.pipeline_mode<synchronous>, transform_indices = @transform_6, window_bounds = array<i64: 1, 128>}, {pipeline_mode = #tpu.pipeline_mode<synchronous>, transform_indices = @transform_7, window_bounds = array<i64: 128, 8>}, {transform_indices = @transform_8, window_bounds = array<i64: 2, 8>}]} {
    %c0 = arith.constant 0 : index
    %c0_0 = arith.constant 0 : index
    %0 = vector.load %arg1[%c0, %c0_0] : memref<2x128xf32, #tpu.memory_space<vmem>>, vector<2x128xf32>
    %c0_1 = arith.constant 0 : index
    %c0_2 = arith.constant 0 : index
    %1 = vector.load %arg3[%c0_1, %c0_2] : memref<128x128xf32, #tpu.memory_space<vmem>>, vector<128x128xf32>
    %cst = arith.constant dense<0.000000e+00> : vector<2x128xf32>
    %2 = tpu.matmul %0, %1, %cst {dimension_numbers = #tpu.dot_dimension_numbers<[1], [0], [0], [1], [0, 0, 1, 1], [], []>} : vector<2x128xf32>, vector<128x128xf32>, vector<2x128xf32> -> vector<2x128xf32>
    %c0_3 = arith.constant 0 : index
    %c0_4 = arith.constant 0 : index
    %3 = vector.load %arg2[%c0_3, %c0_4] : memref<2x16xf32, #tpu.memory_space<vmem>>, vector<2x16xf32>
    %c0_5 = arith.constant 0 : index
    %c0_6 = arith.constant 0 : index
    %4 = vector.load %arg4[%c0_5, %c0_6] : memref<16x128xf32, #tpu.memory_space<vmem>>, vector<16x128xf32>
    %cst_7 = arith.constant dense<0.000000e+00> : vector<2x128xf32>
    %5 = tpu.matmul %3, %4, %cst_7 {dimension_numbers = #tpu.dot_dimension_numbers<[1], [0], [0], [1], [0, 0, 1, 1], [], []>} : vector<2x16xf32>, vector<16x128xf32>, vector<2x128xf32> -> vector<2x128xf32>
    %6 = arith.addf %2, %5 : vector<2x128xf32>
    %c0_8 = arith.constant 0 : index
    %c0_9 = arith.constant 0 : index
    %7 = vector.load %arg5[%c0_8, %c0_9] : memref<1x128xf32, #tpu.memory_space<vmem>>, vector<1x128xf32>
    %8 = vector.broadcast %7 : vector<1x128xf32> to vector<2x128xf32>
    %9 = arith.addf %6, %8 : vector<2x128xf32>
    %cst_10 = arith.constant 0.000000e+00 : f32
    %10 = vector.broadcast %cst_10 : f32 to vector<2x128xf32>
    %11 = arith.maximumf %9, %10 : vector<2x128xf32>
    %c0_11 = arith.constant 0 : index
    %c0_12 = arith.constant 0 : index
    %12 = vector.load %arg6[%c0_11, %c0_12] : memref<128x128xf32, #tpu.memory_space<vmem>>, vector<128x128xf32>
    %cst_13 = arith.constant dense<0.000000e+00> : vector<2x128xf32>
    %13 = tpu.matmul %11, %12, %cst_13 {dimension_numbers = #tpu.dot_dimension_numbers<[1], [0], [0], [1], [0, 0, 1, 1], [], []>} : vector<2x128xf32>, vector<128x128xf32>, vector<2x128xf32> -> vector<2x128xf32>
    %c0_14 = arith.constant 0 : index
    %c0_15 = arith.constant 0 : index
    %14 = vector.load %arg7[%c0_14, %c0_15] : memref<1x128xf32, #tpu.memory_space<vmem>>, vector<1x128xf32>
    %15 = vector.broadcast %14 : vector<1x128xf32> to vector<2x128xf32>
    %16 = arith.addf %13, %15 : vector<2x128xf32>
    %cst_16 = arith.constant 0.000000e+00 : f32
    %17 = vector.broadcast %cst_16 : f32 to vector<2x128xf32>
    %18 = arith.maximumf %16, %17 : vector<2x128xf32>
    %c0_17 = arith.constant 0 : index
    %c0_18 = arith.constant 0 : index
    %19 = vector.load %arg8[%c0_17, %c0_18] : memref<128x8xf32, #tpu.memory_space<vmem>>, vector<128x8xf32>
    %cst_19 = arith.constant dense<0.000000e+00> : vector<2x8xf32>
    %20 = tpu.matmul %18, %19, %cst_19 {dimension_numbers = #tpu.dot_dimension_numbers<[1], [0], [0], [1], [0, 0, 1, 1], [], []>} : vector<2x128xf32>, vector<128x8xf32>, vector<2x8xf32> -> vector<2x8xf32>
    %c0_20 = arith.constant 0 : index
    %c0_21 = arith.constant 0 : index
    %21 = vector.load %arg9[%c0_20, %c0_21] : memref<2x8xf32, #tpu.memory_space<vmem>>, vector<2x8xf32>
    tpu.vector_store %arg9[%c0_20, %c0_21], %20 {strides = array<i32>} : memref<2x8xf32, #tpu.memory_space<vmem>>, vector<2x8xf32>,
    return
  }
  func.func @transform_0(%arg0: i32) -> (i32, i32) {
    %c0_i32 = arith.constant 0 : i32
    %c0_i32_0 = arith.constant 0 : i32
    return %arg0, %c0_i32 : i32, i32
  }
  func.func @transform_1(%arg0: i32) -> (i32, i32) {
    %c0_i32 = arith.constant 0 : i32
    %c0_i32_0 = arith.constant 0 : i32
    return %arg0, %c0_i32 : i32, i32
  }
  func.func @transform_2(%arg0: i32) -> (i32, i32) {
    %c0_i32 = arith.constant 0 : i32
    %c0_i32_0 = arith.constant 0 : i32
    %c0_i32_1 = arith.constant 0 : i32
    return %c0_i32, %c0_i32_0 : i32, i32
  }
  func.func @transform_3(%arg0: i32) -> (i32, i32) {
    %c0_i32 = arith.constant 0 : i32
    %c0_i32_0 = arith.constant 0 : i32
    %c0_i32_1 = arith.constant 0 : i32
    return %c0_i32, %c0_i32_0 : i32, i32
  }
  func.func @transform_4(%arg0: i32) -> (i32, i32) {
    %c0_i32 = arith.constant 0 : i32
    %c0_i32_0 = arith.constant 0 : i32
    %c0_i32_1 = arith.constant 0 : i32
    return %c0_i32, %c0_i32_0 : i32, i32
  }
  func.func @transform_5(%arg0: i32) -> (i32, i32) {
    %c0_i32 = arith.constant 0 : i32
    %c0_i32_0 = arith.constant 0 : i32
    %c0_i32_1 = arith.constant 0 : i32
    return %c0_i32, %c0_i32_0 : i32, i32
  }
  func.func @transform_6(%arg0: i32) -> (i32, i32) {
    %c0_i32 = arith.constant 0 : i32
    %c0_i32_0 = arith.constant 0 : i32
    %c0_i32_1 = arith.constant 0 : i32
    return %c0_i32, %c0_i32_0 : i32, i32
  }
  func.func @transform_7(%arg0: i32) -> (i32, i32) {
    %c0_i32 = arith.constant 0 : i32
    %c0_i32_0 = arith.constant 0 : i32
    %c0_i32_1 = arith.constant 0 : i32
    return %c0_i32, %c0_i32_0 : i32, i32
  }
  func.func @transform_8(%arg0: i32) -> (i32, i32) {
    %c0_i32 = arith.constant 0 : i32
    %c0_i32_0 = arith.constant 0 : i32
    return %arg0, %c0_i32 : i32, i32
  }
}

</mosaic_0001>

<llo_original>
// kernel: tpu_custom_call.1
$region0: #{tpu_custom_call.1}
  #allocation0 [shape = 'u32[]', space=smem, size = 0x4, offset = 0x4, fixed_abs, tag = 'smem constant byte address 0x4 - core index']
  #allocation1 [shape = 'u32[144,128]{1,0:T(1,128)}', space=vmem, size = 0x12000, scoped, tag = 'internal scratch']
  %s0 = inlined_call_operand.vmem [shape: f32[2,128], index: 0, kind: input, shape index: {}]
  %s1 = inlined_call_operand.hbm [shape: f32[2,16], index: 1, kind: input, shape index: {}]
  %s2 = inlined_call_operand.vmem [shape: f32[128,128], index: 2, kind: input, shape index: {}]
  %s3 = inlined_call_operand.vmem [shape: f32[16,128], index: 3, kind: input, shape index: {}]
  %s4 = inlined_call_operand.hbm [shape: f32[1,128], index: 4, kind: input, shape index: {}]
  %s5 = inlined_call_operand.hbm [shape: f32[128,128], index: 5, kind: input, shape index: {}]
  %s6 = inlined_call_operand.vmem [shape: f32[1,128], index: 6, kind: input, shape index: {}]
  %s7 = inlined_call_operand.vmem [shape: f32[128,8], index: 7, kind: input, shape index: {}]
  %s8 = inlined_call_operand.hbm [shape: f32[2,8], index: 8, kind: output, shape index: {}]
  %s9 = sld [smem:[#allocation0]]
  $region54: #{tpu_custom_call.1} parent=0
    _
  %s11 = ssub.s32 1, %s9
  %s12 = scalar_select 0, %s11, %s9
  $region1: #{tpu_custom_call.1} parent=0
    #allocation2 [shape = 'u8[1024]{0}', space=vmem, size = 0x400, scoped, tag = 'input window, operand 1, single buffered']
    #allocation3 [shape = 's32[1]{0}', space=sflag, size = 0x4, scoped, tag = 'scoped memory for tpu_custom_call.1']
    #allocation4 [shape = 's32[1]{0}', space=sflag, size = 0x4, scoped, tag = 'scoped memory for tpu_custom_call.1']
    #allocation5 [shape = 'u8[512]{0}', space=vmem, size = 0x400, scoped, tag = 'input window, operand 4, single buffered']
    #allocation6 [shape = 's32[1]{0}', space=sflag, size = 0x4, scoped, tag = 'scoped memory for tpu_custom_call.1']
    #allocation7 [shape = 'u8[65536]{0}', space=vmem, size = 0x10000, scoped, tag = 'input window, operand 5, single buffered']
    #allocation8 [shape = 'u8[1024]{0}', space=vmem, size = 0x400, scoped, tag = 'output window, operand 0, single buffered']
    %13 = vsyncpa [#allocation3], 0
    %14 = vsyncpa [#allocation6], 0
    %15 = vsyncpa [#allocation4], 0
    // Predicated region
    $region2: #{tpu_custom_call.1} parent=1 // pred_check
      _
    $region3: #{tpu_custom_call.1} parent=1 // pred_check_branch
      %17 = sbr.rel (0) target = $region5
    $region4: #{tpu_custom_call.1} parent=1 // pred_region
      _
    $region5: #{tpu_custom_call.1} parent=1 // pred_fallthru
      _
    // Predicated region
    $region6: #{tpu_custom_call.1} parent=1 // pred_check
      _
    $region7: #{tpu_custom_call.1} parent=1 // pred_check_branch
      %19 = sbr.rel (0) target = $region9
    $region8: #{tpu_custom_call.1} parent=1 // pred_region
      %s21 = ssub.s32 32, 32
      %22 = vsyncadd [#allocation3], %s21
      %s24 = sshll.u32 [#allocation2], 4
      %s25 = int_to_ptr.vmem [resolvable:$true] %s24
      %27 = dma.hbm_to_vmem [thread:$0]  %s1, 32, %s25, [#allocation3]
    $region9: #{tpu_custom_call.1} parent=1 // pred_fallthru
      _
    // Predicated region
    $region10: #{tpu_custom_call.1} parent=1 // pred_check
      _
    $region11: #{tpu_custom_call.1} parent=1 // pred_check_branch
      %29 = sbr.rel (0) target = $region13
    $region12: #{tpu_custom_call.1} parent=1 // pred_region
      _
    $region13: #{tpu_custom_call.1} parent=1 // pred_fallthru
      _
    // Predicated region
    $region14: #{tpu_custom_call.1} parent=1 // pred_check
      _
    $region15: #{tpu_custom_call.1} parent=1 // pred_check_branch
      %31 = sbr.rel (0) target = $region17
    $region16: #{tpu_custom_call.1} parent=1 // pred_region
      _
    $region17: #{tpu_custom_call.1} parent=1 // pred_fallthru
      _
    // Predicated region
    $region18: #{tpu_custom_call.1} parent=1 // pred_check
      _
    $region19: #{tpu_custom_call.1} parent=1 // pred_check_branch
      %33 = sbr.rel (0) target = $region21
    $region20: #{tpu_custom_call.1} parent=1 // pred_region
      %s35 = ssub.s32 16, 16
      %36 = vsyncadd [#allocation6], %s35
      %s38 = sshll.u32 [#allocation5], 4
      %s39 = int_to_ptr.vmem [resolvable:$true] %s38
      %41 = dma.hbm_to_vmem [thread:$0]  %s4, 16, %s39, [#allocation6]
    $region21: #{tpu_custom_call.1} parent=1 // pred_fallthru
      _
    // Predicated region
    $region22: #{tpu_custom_call.1} parent=1 // pred_check
      _
    $region23: #{tpu_custom_call.1} parent=1 // pred_check_branch
      %43 = sbr.rel (0) target = $region25
    $region24: #{tpu_custom_call.1} parent=1 // pred_region
      %s45 = ssub.s32 2048, 2048
      %46 = vsyncadd [#allocation6], %s45
      %s47 = sshll.u32 [#allocation7], 4
      %s48 = int_to_ptr.vmem [resolvable:$true] %s47
      %53 = dma.hbm_to_vmem [thread:$0]  %s5, 2048, %s48, [#allocation6], 128, 128, 8
    $region25: #{tpu_custom_call.1} parent=1 // pred_fallthru
      _
    // Predicated region
    $region26: #{tpu_custom_call.1} parent=1 // pred_check
      _
    $region27: #{tpu_custom_call.1} parent=1 // pred_check_branch
      %55 = sbr.rel (0) target = $region29
    $region28: #{tpu_custom_call.1} parent=1 // pred_region
      _
    $region29: #{tpu_custom_call.1} parent=1 // pred_fallthru
      _
    // Predicated region
    $region30: #{tpu_custom_call.1} parent=1 // pred_check
      _
    $region31: #{tpu_custom_call.1} parent=1 // pred_check_branch
      %57 = sbr.rel (0) target = $region33
    $region32: #{tpu_custom_call.1} parent=1 // pred_region
      _
    $region33: #{tpu_custom_call.1} parent=1 // pred_fallthru
      _
    // Predicated region
    $region34: #{tpu_custom_call.1} parent=1 // pred_check
      _
    $region35: #{tpu_custom_call.1} parent=1 // pred_check_branch
      %59 = sbr.rel (0) target = $region37
    $region36: #{tpu_custom_call.1} parent=1 // pred_region
      %60 = dma.done [#allocation3], 32
    $region37: #{tpu_custom_call.1} parent=1 // pred_fallthru
      _
    // Predicated region
    $region38: #{tpu_custom_call.1} parent=1 // pred_check
      _
    $region39: #{tpu_custom_call.1} parent=1 // pred_check_branch
      %62 = sbr.rel (0) target = $region41
    $region40: #{tpu_custom_call.1} parent=1 // pred_region
      %63 = dma.done [#allocation6], 16
    $region41: #{tpu_custom_call.1} parent=1 // pred_fallthru
      _
    // Predicated region
    $region42: #{tpu_custom_call.1} parent=1 // pred_check
      _
    $region43: #{tpu_custom_call.1} parent=1 // pred_check_branch
      %65 = sbr.rel (0) target = $region45
    $region44: #{tpu_custom_call.1} parent=1 // pred_region
      %66 = dma.done [#allocation6], 2048
    $region45: #{tpu_custom_call.1} parent=1 // pred_fallthru
      _
    %v67 = vld [vmem:[%s0] sm:$0x3]
    %v68 = vld [vmem:[%s2] sm:$0xff]
    %v69 = vld [vmem:[%s2 + $0x8] sm:$0xff]
    %v70 = vld [vmem:[%s2 + $0x10] sm:$0xff]
    %v71 = vld [vmem:[%s2 + $0x18] sm:$0xff]
    %v72 = vld [vmem:[%s2 + $0x20] sm:$0xff]
    %v73 = vld [vmem:[%s2 + $0x28] sm:$0xff]
    %v74 = vld [vmem:[%s2 + $0x30] sm:$0xff]
    %v75 = vld [vmem:[%s2 + $0x38] sm:$0xff]
    %v76 = vld [vmem:[%s2 + $0x40] sm:$0xff]
    %v77 = vld [vmem:[%s2 + $0x48] sm:$0xff]
    %v78 = vld [vmem:[%s2 + $0x50] sm:$0xff]
    %v79 = vld [vmem:[%s2 + $0x58] sm:$0xff]
    %v80 = vld [vmem:[%s2 + $0x60] sm:$0xff]
    %v81 = vld [vmem:[%s2 + $0x68] sm:$0xff]
    %v82 = vld [vmem:[%s2 + $0x70] sm:$0xff]
    %v83 = vld [vmem:[%s2 + $0x78] sm:$0xff]
    %v84 = vld [vmem:[#allocation2] sm:$0x3]
    %v85 = vld [vmem:[%s3] sm:$0xff]
    %v86 = vld [vmem:[%s3 + $0x8] sm:$0xff]
    %vm87 = vcmask 130048
    %v89 = vsel %vm87, %v84, 0
    %91 = vmatprep.subr.mxu0 0.0
    %92 = vmatpush1.msra.mxu0 %v85
    %93 = vmatprep.subr.mxu0 0.0
    %94 = vmatpush1.msra.mxu0 %v86
    %95 = vmatprep.subr.mxu0 0.0
    %96 = vmatpush1.msra.mxu0 0.0
    %97 = vmatprep.subr.mxu0 0.0
    %98 = vmatpush1.msra.mxu0 0.0
    %99 = vmatprep.subr.mxu0 0.0
    %100 = vmatpush1.msra.mxu0 0.0
    %101 = vmatprep.subr.mxu0 0.0
    %102 = vmatpush1.msra.mxu0 0.0
    %103 = vmatprep.subr.mxu0 0.0
    %104 = vmatpush1.msra.mxu0 0.0
    %105 = vmatprep.subr.mxu0 0.0
    %106 = vmatpush1.msra.mxu0 0.0
    %107 = vmatprep.subr.mxu0 0.0
    %108 = vmatpush1.msra.mxu0 0.0
    %109 = vmatprep.subr.mxu0 0.0
    %110 = vmatpush1.msra.mxu0 0.0
    %111 = vmatprep.subr.mxu0 0.0
    %112 = vmatpush1.msra.mxu0 0.0
    %113 = vmatprep.subr.mxu0 0.0
    %114 = vmatpush1.msra.mxu0 0.0
    %115 = vmatprep.subr.mxu0 0.0
    %116 = vmatpush1.msra.mxu0 0.0
    %117 = vmatprep.subr.mxu0 0.0
    %118 = vmatpush1.msra.mxu0 0.0
    %119 = vmatprep.subr.mxu0 0.0
    %120 = vmatpush1.msra.mxu0 0.0
    %121 = vmatprep.subr.mxu0 0.0
    %122 = vmatpush1.msra.mxu0 0.0
    %123 = vmatprep.subr.mxu0 0.0
    %124 = vmatpush1.msra.mxu0 0.0
    %125 = vmatprep.subr.mxu0 0.0
    %126 = vmatpush1.msra.mxu0 0.0
    %127 = vmatprep.subr.mxu0 0.0
    %128 = vmatpush1.msra.mxu0 0.0
    %129 = vmatprep.subr.mxu0 0.0
    %130 = vmatpush1.msra.mxu0 0.0
    %131 = vmatprep.subr.mxu0 0.0
    %132 = vmatpush1.msra.mxu0 0.0
    %133 = vmatprep.subr.mxu0 0.0
    %134 = vmatpush1.msra.mxu0 0.0
    %135 = vmatprep.subr.mxu0 0.0
    %136 = vmatpush1.msra.mxu0 0.0
    %137 = vmatprep.subr.mxu0 0.0
    %138 = vmatpush1.msra.mxu0 0.0
    %139 = vmatprep.subr.mxu0 0.0
    %140 = vmatpush1.msra.mxu0 0.0
    %141 = vmatprep.subr.mxu0 0.0
    %142 = vmatpush1.msra.mxu0 0.0
    %143 = vmatprep.subr.mxu0 0.0
    %144 = vmatpush1.msra.mxu0 0.0
    %145 = vmatprep.subr.mxu0 0.0
    %146 = vmatpush1.msra.mxu0 0.0
    %147 = vmatprep.subr.mxu0 0.0
    %148 = vmatpush1.msra.mxu0 0.0
    %149 = vmatprep.subr.mxu0 0.0
    %150 = vmatpush1.msra.mxu0 0.0
    %151 = vmatprep.subr.mxu0 0.0
    %152 = vmatpush1.msra.mxu0 0.0
    %153 = vmatprep.subr.mxu0 0.0
    %154 = vmatpush1.msra.mxu0 0.0
    %155 = vmatprep.mubr.f32.mxu0 0.0
    %156 = vmatmul.mubr.f32.gmra.mrb[0].mxu0 %v89
    %v157 = vpop.f32.mrb[0].mxu0
    %v158 = vadd.f32 0.0, %v157
    %v159 = vpop.f32.mrb[0].mxu0
    %160 = vdwg.mxu0
    %161 = vmatprep.subr.mxu0 0.0
    %162 = vmatpush1.msra.mxu0 %v68
    %163 = vmatprep.subr.mxu0 0.0
    %164 = vmatpush1.msra.mxu0 %v69
    %165 = vmatprep.subr.mxu0 0.0
    %166 = vmatpush1.msra.mxu0 %v70
    %167 = vmatprep.subr.mxu0 0.0
    %168 = vmatpush1.msra.mxu0 %v71
    %169 = vmatprep.subr.mxu0 0.0
    %170 = vmatpush1.msra.mxu0 %v72
    %171 = vmatprep.subr.mxu0 0.0
    %172 = vmatpush1.msra.mxu0 %v73
    %173 = vmatprep.subr.mxu0 0.0
    %174 = vmatpush1.msra.mxu0 %v74
    %175 = vmatprep.subr.mxu0 0.0
    %176 = vmatpush1.msra.mxu0 %v75
    %177 = vmatprep.subr.mxu0 0.0
    %178 = vmatpush1.msra.mxu0 %v76
    %179 = vmatprep.subr.mxu0 0.0
    %180 = vmatpush1.msra.mxu0 %v77
    %181 = vmatprep.subr.mxu0 0.0
    %182 = vmatpush1.msra.mxu0 %v78
    %183 = vmatprep.subr.mxu0 0.0
    %184 = vmatpush1.msra.mxu0 %v79
    %185 = vmatprep.subr.mxu0 0.0
    %186 = vmatpush1.msra.mxu0 %v80
    %187 = vmatprep.subr.mxu0 0.0
    %188 = vmatpush1.msra.mxu0 %v81
    %189 = vmatprep.subr.mxu0 0.0
    %190 = vmatpush1.msra.mxu0 %v82
    %191 = vmatprep.subr.mxu0 0.0
    %192 = vmatpush1.msra.mxu0 %v83
    %193 = vmatprep.subr.mxu0 0.0
    %194 = vmatpush1.msra.mxu0 0.0
    %195 = vmatprep.subr.mxu0 0.0
    %196 = vmatpush1.msra.mxu0 0.0
    %197 = vmatprep.subr.mxu0 0.0
    %198 = vmatpush1.msra.mxu0 0.0
    %199 = vmatprep.subr.mxu0 0.0
    %200 = vmatpush1.msra.mxu0 0.0
    %201 = vmatprep.subr.mxu0 0.0
    %202 = vmatpush1.msra.mxu0 0.0
    %203 = vmatprep.subr.mxu0 0.0
    %204 = vmatpush1.msra.mxu0 0.0
    %205 = vmatprep.subr.mxu0 0.0
    %206 = vmatpush1.msra.mxu0 0.0
    %207 = vmatprep.subr.mxu0 0.0
    %208 = vmatpush1.msra.mxu0 0.0
    %209 = vmatprep.subr.mxu0 0.0
    %210 = vmatpush1.msra.mxu0 0.0
    %211 = vmatprep.subr.mxu0 0.0
    %212 = vmatpush1.msra.mxu0 0.0
    %213 = vmatprep.subr.mxu0 0.0
    %214 = vmatpush1.msra.mxu0 0.0
    %215 = vmatprep.subr.mxu0 0.0
    %216 = vmatpush1.msra.mxu0 0.0
    %217 = vmatprep.subr.mxu0 0.0
    %218 = vmatpush1.msra.mxu0 0.0
    %219 = vmatprep.subr.mxu0 0.0
    %220 = vmatpush1.msra.mxu0 0.0
    %221 = vmatprep.subr.mxu0 0.0
    %222 = vmatpush1.msra.mxu0 0.0
    %223 = vmatprep.subr.mxu0 0.0
    %224 = vmatpush1.msra.mxu0 0.0
    %225 = vmatprep.mubr.f32.mxu0 0.0
    %226 = vmatmul.mubr.f32.gmra.mrb[0].mxu0 %v67
    %v227 = vpop.f32.mrb[0].mxu0
    %v228 = vadd.f32 %v158, %v227
    %v229 = vpop.f32.mrb[0].mxu0
    %230 = vdwg.mxu0
    %v231 = vld [vmem:[#allocation5] sm:$0x1]
    %v233 = vlaneseq
    %v234 = vshrl.u32 %v233, 7
    %v235 = vsub.s32 0, %v234
    %v236 = vrot.slane %v231, %v235
    %v238 = vadd.f32 %v228, %v236
    %v239 = vmax.f32 %v238, 0.0
    %v240 = vld [vmem:[#allocation7] sm:$0xff]
    %v241 = vld [vmem:[#allocation7 + $0x8] sm:$0xff]
    %v242 = vld [vmem:[#allocation7 + $0x10] sm:$0xff]
    %v243 = vld [vmem:[#allocation7 + $0x18] sm:$0xff]
    %v244 = vld [vmem:[#allocation7 + $0x20] sm:$0xff]
    %v245 = vld [vmem:[#allocation7 + $0x28] sm:$0xff]
    %v246 = vld [vmem:[#allocation7 + $0x30] sm:$0xff]
    %v247 = vld [vmem:[#allocation7 + $0x38] sm:$0xff]
    %v248 = vld [vmem:[#allocation7 + $0x40] sm:$0xff]
    %v249 = vld [vmem:[#allocation7 + $0x48] sm:$0xff]
    %v250 = vld [vmem:[#allocation7 + $0x50] sm:$0xff]
    %v251 = vld [vmem:[#allocation7 + $0x58] sm:$0xff]
    %v252 = vld [vmem:[#allocation7 + $0x60] sm:$0xff]
    %v253 = vld [vmem:[#allocation7 + $0x68] sm:$0xff]
    %v254 = vld [vmem:[#allocation7 + $0x70] sm:$0xff]
    %v255 = vld [vmem:[#allocation7 + $0x78] sm:$0xff]
    %v256 = vld [vmem:[%s6] sm:$0x1]
    %v258 = vlaneseq
    %v259 = vshrl.u32 %v258, 7
    %v260 = vsub.s32 0, %v259
    %v261 = vrot.slane %v256, %v260
    %263 = vmatprep.subr.mxu0 0.0
    %264 = vmatpush1.msra.mxu0 %v240
    %265 = vmatprep.subr.mxu0 0.0
    %266 = vmatpush1.msra.mxu0 %v241
    %267 = vmatprep.subr.mxu0 0.0
    %268 = vmatpush1.msra.mxu0 %v242
    %269 = vmatprep.subr.mxu0 0.0
    %270 = vmatpush1.msra.mxu0 %v243
    %271 = vmatprep.subr.mxu0 0.0
    %272 = vmatpush1.msra.mxu0 %v244
    %273 = vmatprep.subr.mxu0 0.0
    %274 = vmatpush1.msra.mxu0 %v245
    %275 = vmatprep.subr.mxu0 0.0
    %276 = vmatpush1.msra.mxu0 %v246
    %277 = vmatprep.subr.mxu0 0.0
    %278 = vmatpush1.msra.mxu0 %v247
    %279 = vmatprep.subr.mxu0 0.0
    %280 = vmatpush1.msra.mxu0 %v248
    %281 = vmatprep.subr.mxu0 0.0
    %282 = vmatpush1.msra.mxu0 %v249
    %283 = vmatprep.subr.mxu0 0.0
    %284 = vmatpush1.msra.mxu0 %v250
    %285 = vmatprep.subr.mxu0 0.0
    %286 = vmatpush1.msra.mxu0 %v251
    %287 = vmatprep.subr.mxu0 0.0
    %288 = vmatpush1.msra.mxu0 %v252
    %289 = vmatprep.subr.mxu0 0.0
    %290 = vmatpush1.msra.mxu0 %v253
    %291 = vmatprep.subr.mxu0 0.0
    %292 = vmatpush1.msra.mxu0 %v254
    %293 = vmatprep.subr.mxu0 0.0
    %294 = vmatpush1.msra.mxu0 %v255
    %295 = vmatprep.subr.mxu0 0.0
    %296 = vmatpush1.msra.mxu0 0.0
    %297 = vmatprep.subr.mxu0 0.0
    %298 = vmatpush1.msra.mxu0 0.0
    %299 = vmatprep.subr.mxu0 0.0
    %300 = vmatpush1.msra.mxu0 0.0
    %301 = vmatprep.subr.mxu0 0.0
    %302 = vmatpush1.msra.mxu0 0.0
    %303 = vmatprep.subr.mxu0 0.0
    %304 = vmatpush1.msra.mxu0 0.0
    %305 = vmatprep.subr.mxu0 0.0
    %306 = vmatpush1.msra.mxu0 0.0
    %307 = vmatprep.subr.mxu0 0.0
    %308 = vmatpush1.msra.mxu0 0.0
    %309 = vmatprep.subr.mxu0 0.0
    %310 = vmatpush1.msra.mxu0 0.0
    %311 = vmatprep.subr.mxu0 0.0
    %312 = vmatpush1.msra.mxu0 0.0
    %313 = vmatprep.subr.mxu0 0.0
    %314 = vmatpush1.msra.mxu0 0.0
    %315 = vmatprep.subr.mxu0 0.0
    %316 = vmatpush1.msra.mxu0 0.0
    %317 = vmatprep.subr.mxu0 0.0
    %318 = vmatpush1.msra.mxu0 0.0
    %319 = vmatprep.subr.mxu0 0.0
    %320 = vmatpush1.msra.mxu0 0.0
    %321 = vmatprep.subr.mxu0 0.0
    %322 = vmatpush1.msra.mxu0 0.0
    %323 = vmatprep.subr.mxu0 0.0
    %324 = vmatpush1.msra.mxu0 0.0
    %325 = vmatprep.subr.mxu0 0.0
    %326 = vmatpush1.msra.mxu0 0.0
    %327 = vmatprep.mubr.f32.mxu0 0.0
    %328 = vmatmul.mubr.f32.gmra.mrb[0].mxu0 %v239
    %v329 = vpop.f32.mrb[0].mxu0
    %v330 = vadd.f32 %v261, %v329
    %v331 = vpop.f32.mrb[0].mxu0
    %332 = vdwg.mxu0
    %v333 = vmax.f32 %v330, 0.0
    %v334 = vld [vmem:[%s7] sm:$0xff]
    %v335 = vld [vmem:[%s7 + $0x8] sm:$0xff]
    %v336 = vld [vmem:[%s7 + $0x10] sm:$0xff]
    %v337 = vld [vmem:[%s7 + $0x18] sm:$0xff]
    %v338 = vld [vmem:[%s7 + $0x20] sm:$0xff]
    %v339 = vld [vmem:[%s7 + $0x28] sm:$0xff]
    %v340 = vld [vmem:[%s7 + $0x30] sm:$0xff]
    %v341 = vld [vmem:[%s7 + $0x38] sm:$0xff]
    %v342 = vld [vmem:[%s7 + $0x40] sm:$0xff]
    %v343 = vld [vmem:[%s7 + $0x48] sm:$0xff]
    %v344 = vld [vmem:[%s7 + $0x50] sm:$0xff]
    %v345 = vld [vmem:[%s7 + $0x58] sm:$0xff]
    %v346 = vld [vmem:[%s7 + $0x60] sm:$0xff]
    %v347 = vld [vmem:[%s7 + $0x68] sm:$0xff]
    %v348 = vld [vmem:[%s7 + $0x70] sm:$0xff]
    %v349 = vld [vmem:[%s7 + $0x78] sm:$0xff]
    %350 = vmatprep.subr.mxu0 0.0
    %351 = vmatpush1.msra.mxu0 %v334
    %352 = vmatprep.subr.mxu0 0.0
    %353 = vmatpush1.msra.mxu0 %v335
    %354 = vmatprep.subr.mxu0 0.0
    %355 = vmatpush1.msra.mxu0 %v336
    %356 = vmatprep.subr.mxu0 0.0
    %357 = vmatpush1.msra.mxu0 %v337
    %358 = vmatprep.subr.mxu0 0.0
    %359 = vmatpush1.msra.mxu0 %v338
    %360 = vmatprep.subr.mxu0 0.0
    %361 = vmatpush1.msra.mxu0 %v339
    %362 = vmatprep.subr.mxu0 0.0
    %363 = vmatpush1.msra.mxu0 %v340
    %364 = vmatprep.subr.mxu0 0.0
    %365 = vmatpush1.msra.mxu0 %v341
    %366 = vmatprep.subr.mxu0 0.0
    %367 = vmatpush1.msra.mxu0 %v342
    %368 = vmatprep.subr.mxu0 0.0
    %369 = vmatpush1.msra.mxu0 %v343
    %370 = vmatprep.subr.mxu0 0.0
    %371 = vmatpush1.msra.mxu0 %v344
    %372 = vmatprep.subr.mxu0 0.0
    %373 = vmatpush1.msra.mxu0 %v345
    %374 = vmatprep.subr.mxu0 0.0
    %375 = vmatpush1.msra.mxu0 %v346
    %376 = vmatprep.subr.mxu0 0.0
    %377 = vmatpush1.msra.mxu0 %v347
    %378 = vmatprep.subr.mxu0 0.0
    %379 = vmatpush1.msra.mxu0 %v348
    %380 = vmatprep.subr.mxu0 0.0
    %381 = vmatpush1.msra.mxu0 %v349
    %382 = vmatprep.subr.mxu0 0.0
    %383 = vmatpush1.msra.mxu0 0.0
    %384 = vmatprep.subr.mxu0 0.0
    %385 = vmatpush1.msra.mxu0 0.0
    %386 = vmatprep.subr.mxu0 0.0
    %387 = vmatpush1.msra.mxu0 0.0
    %388 = vmatprep.subr.mxu0 0.0
    %389 = vmatpush1.msra.mxu0 0.0
    %390 = vmatprep.subr.mxu0 0.0
    %391 = vmatpush1.msra.mxu0 0.0
    %392 = vmatprep.subr.mxu0 0.0
    %393 = vmatpush1.msra.mxu0 0.0
    %394 = vmatprep.subr.mxu0 0.0
    %395 = vmatpush1.msra.mxu0 0.0
    %396 = vmatprep.subr.mxu0 0.0
    %397 = vmatpush1.msra.mxu0 0.0
    %398 = vmatprep.subr.mxu0 0.0
    %399 = vmatpush1.msra.mxu0 0.0
    %400 = vmatprep.subr.mxu0 0.0
    %401 = vmatpush1.msra.mxu0 0.0
    %402 = vmatprep.subr.mxu0 0.0
    %403 = vmatpush1.msra.mxu0 0.0
    %404 = vmatprep.subr.mxu0 0.0
    %405 = vmatpush1.msra.mxu0 0.0
    %406 = vmatprep.subr.mxu0 0.0
    %407 = vmatpush1.msra.mxu0 0.0
    %408 = vmatprep.subr.mxu0 0.0
    %409 = vmatpush1.msra.mxu0 0.0
    %410 = vmatprep.subr.mxu0 0.0
    %411 = vmatpush1.msra.mxu0 0.0
    %412 = vmatprep.subr.mxu0 0.0
    %413 = vmatpush1.msra.mxu0 0.0
    %414 = vmatprep.mubr.f32.mxu0 0.0
    %415 = vmatmul.mubr.f32.gmra.mrb[0].mxu0 %v333
    %v416 = vpop.f32.mrb[0].mxu0
    %v417 = vadd.f32 0.0, %v416
    %v418 = vpop.f32.mrb[0].mxu0
    %419 = vdwg.mxu0
    %vm420 = vcmask 58368
    %421 = vst.msk [vmem:[#allocation8] sm:$0x3] %vm420, %v417
    // Predicated region
    $region46: #{tpu_custom_call.1} parent=1 // pred_check
      _
    $region47: #{tpu_custom_call.1} parent=1 // pred_check_branch
      %423 = sbr.rel (0) target = $region49
    $region48: #{tpu_custom_call.1} parent=1 // pred_region
      %s425 = ssub.s32 32, 32
      %426 = vsyncadd [#allocation4], %s425
      %s428 = sshll.u32 [#allocation8], 4
      %s429 = int_to_ptr.vmem [resolvable:$true] %s428
      %431 = dma.vmem_to_hbm [thread:$0]  %s429, 32, %s8, [#allocation4]
    $region49: #{tpu_custom_call.1} parent=1 // pred_fallthru
      _
    // Predicated region
    $region50: #{tpu_custom_call.1} parent=1 // pred_check
      _
    $region51: #{tpu_custom_call.1} parent=1 // pred_check_branch
      %433 = sbr.rel (0) target = $region53
    $region52: #{tpu_custom_call.1} parent=1 // pred_region
      %434 = dma.done [#allocation4], 32
    $region53: #{tpu_custom_call.1} parent=1 // pred_fallthru
      _
    %435 = vsyncpa [#allocation3], 1
    %436 = vsyncpa [#allocation6], 1
    %437 = vsyncpa [#allocation4], 1

</llo_original>
